<compile_context>
chip_gen: v5e
topology: v5e:2x2
jax: 0.10.0
libtpu: 0.0.40
codegen_flags: <defaults>
</compile_context>

<pallas_src>
import functools

import jax
import jax.numpy as jnp
from jax.experimental import pallas as pl
from jax.experimental.pallas import tpu as pltpu


def _cdiv(a, b):
    return -(-a // b)


def _round_up(x, m):
    return ((x + m - 1) // m) * m


def _vmem_limit_bytes():
    """Scoped-VMEM limit to request: half of physical VMEM, capped at 64 MiB."""
    cap = None
    try:
        cap = getattr(pltpu.get_tpu_info(), "vmem_capacity_bytes", None)
    except Exception:
        cap = None
    if not cap:
        cap = 64 * 1024 * 1024  # conservative default (v7x per-core VMEM)
    return int(min(cap // 2, 64 * 1024 * 1024))


def _pick_tile_m(m, k, n, vmem_limit_bytes, x_itemsize, out_itemsize):
    """Row tile: VMEM- and byte-capped, then balanced to minimize tail padding."""
    k_lanes = _round_up(max(k, 1), 128)     # x tile is lane-padded in VMEM
    n_lanes = _round_up(max(n, 1), 128)

    # Grid-invariant operands (double-buffered worst case): W^T + packed params.
    fixed = 2 * (k_lanes * n_lanes * max(x_itemsize, 2) + 8 * n_lanes * 4)
    # Per row of a tile: 2x-buffered x + out tiles (lane-padded), ~4 f32 temps
    # (y, centered, squared, normalized/cast) regardless of I/O dtype.
    per_row = (2 * k_lanes * max(x_itemsize, 2)
               + 2 * n_lanes * max(out_itemsize, 2)
               + 4 * n_lanes * 4)

    budget = int(vmem_limit_bytes * 0.6) - fixed
    cap_vmem = budget // per_row if budget > 0 else 8
    cap_bytes = (4 * 1024 * 1024) // (n_lanes * 4)   # <= ~4 MiB of f32 temps/tile
    cap = max(min(cap_vmem, cap_bytes, 2048), 8)

    # Balance tiles instead of "largest tile, then round M up to it":
    # tail waste is now < one alignment unit, and extra grid steps are ~free.
    num_tiles = max(_cdiv(m, cap), 1)
    t = _cdiv(m, num_tiles)
    t = _round_up(t, 256) if t >= 256 else _round_up(t, 8)
    return max(min(t, _round_up(m, 8)), 8)


def _time_embedding_kernel(x_ref, w_ref, p_ref, o_ref, *, eps):
    # x_ref: (TM, K)   w_ref: (K, N)   p_ref: (3, N) = [bias; gamma; beta]
    # o_ref: (TM, N)
    params = p_ref[...].astype(jnp.float32)
    b = params[0:1, :]
    g = params[1:2, :]
    bt = params[2:3, :]

    # MXU matmul with f32 accumulation; contraction padding for tiny K is free
    # in this memory-bound kernel.
    y = jnp.dot(x_ref[...], w_ref[...], preferred_element_type=jnp.float32) + b

    # torch.nn.LayerNorm: biased variance, eps inside the sqrt.
    mu = jnp.mean(y, axis=-1, keepdims=True)
    centered = y - mu
    var = jnp.mean(centered * centered, axis=-1, keepdims=True)
    inv = jax.lax.rsqrt(var + eps)
    o_ref[...] = (centered * inv * g + bt).astype(o_ref.dtype)


def time_embedding(x, weight, bias, gamma, beta, *, eps=1e-5, tile_m=None):
    """x: (B, S, input_dim). weight: (d_model, input_dim) as in nn.Linear."""
    B, S, K = x.shape
    N = weight.shape[0]
    M = B * S

    x_itemsize = jnp.dtype(x.dtype).itemsize
    out_itemsize = x_itemsize
    vmem_limit = _vmem_limit_bytes()
    if tile_m is None:
        tile_m = _pick_tile_m(M, K, N, vmem_limit, x_itemsize, out_itemsize)
    m_pad = _round_up(M, tile_m)            # ragged tail handled by row padding

    x2 = x.reshape(M, K)
    if m_pad != M:
        x2 = jnp.pad(x2, ((0, m_pad - M), (0, 0)))

    # (K, N) weight matching x's dtype so bf16 inputs get a native bf16 MXU pass.
    # (One-time transpose; negligible for small K, params are reused untouched.)
    w_t = weight.T.astype(x.dtype)
    # Pack LN/bias params into a single f32 operand: one DMA / buffer, f32 math.
    params = jnp.stack(
        [bias.astype(jnp.float32),
         gamma.astype(jnp.float32),
         beta.astype(jnp.float32)], axis=0)           # (3, N)

    kernel = functools.partial(_time_embedding_kernel, eps=eps)
    grid = (m_pad // tile_m,)

    cost = pl.CostEstimate(
        flops=int(2 * m_pad * K * N + 8 * m_pad * N),
        transcendentals=int(m_pad),
        bytes_accessed=int(m_pad * K * x_itemsize + m_pad * N * out_itemsize
                           + w_t.size * jnp.dtype(w_t.dtype).itemsize
                           + params.size * 4),
    )

    out = pl.pallas_call(
        kernel,
        out_shape=jax.ShapeDtypeStruct((m_pad, N), x.dtype),
        grid_spec=pltpu.PrefetchScalarGridSpec(
            num_scalar_prefetch=0,
            grid=grid,
            in_specs=[
                pl.BlockSpec((tile_m, K), lambda i: (i, 0)),   # x rows
                pl.BlockSpec((K, N), lambda i: (0, 0)),        # W^T (grid-invariant)
                pl.BlockSpec((3, N), lambda i: (0, 0)),        # [bias; gamma; beta]
            ],
            out_specs=pl.BlockSpec((tile_m, N), lambda i: (i, 0)),
        ),
        compiler_params=pltpu.CompilerParams(
            dimension_semantics=("parallel",),
            vmem_limit_bytes=vmem_limit,
        ),
        cost_estimate=cost,
    )(x2, w_t, params)

    if m_pad != M:
        out = out[:M]
    return out.reshape(B, S, N)


def _reference(x, weight, bias, gamma, beta, eps=1e-5):
    y = jnp.einsum("bsk,nk->bsn", x, weight) + bias
    mu = jnp.mean(y, axis=-1, keepdims=True)
    var = jnp.mean((y - mu) ** 2, axis=-1, keepdims=True)
    return (y - mu) / jnp.sqrt(var + eps) * gamma + beta


if __name__ == "__main__":
    # Small shapes consistent with the module: batch=2, seq=8, input_dim=4, d_model=32
    B, S, input_dim, d_model = 2, 8, 4, 32

    key = jax.random.PRNGKey(0)
    kx, kw, kb, kg, kbeta = jax.random.split(key, 5)

    x = jax.random.normal(kx, (B, S, input_dim), dtype=jnp.float32)
    # nn.Linear: weight (d_model, input_dim), bias (d_model,)
    weight = jax.random.normal(kw, (d_model, input_dim), dtype=jnp.float32) * 0.1
    bias = jax.random.normal(kb, (d_model,), dtype=jnp.float32) * 0.1
    # nn.LayerNorm params (perturbed from ones/zeros for a non-trivial test)
    gamma = 1.0 + 0.1 * jax.random.normal(kg, (d_model,), dtype=jnp.float32)
    beta = 0.1 * jax.random.normal(kbeta, (d_model,), dtype=jnp.float32)

    out = time_embedding(x, weight, bias, gamma, beta)
    out = jax.block_until_ready(out)

    ref = _reference(x, weight, bias, gamma, beta)
    assert out.shape == (B, S, d_model)
    assert jnp.allclose(out, ref, atol=1e-5, rtol=1e-5), "mismatch vs reference"

    print("KERNEL_OK")
</pallas_src>

<mosaic_0001>
module attributes {stable_mosaic.version = 11 : i64} {
  func.func @_time_embedding_kernel(%arg0: i32, %arg1: memref<16x4xf32, #tpu.memory_space<vmem>>, %arg2: memref<4x32xf32, #tpu.memory_space<vmem>>, %arg3: memref<3x32xf32, #tpu.memory_space<vmem>>, %arg4: memref<16x32xf32, #tpu.memory_space<vmem>>) attributes {dimension_semantics = [#tpu.dimension_semantics<parallel>], iteration_bounds = array<i64: 1>, scalar_prefetch = 0 : i64, scratch_operands = 0 : i64, tpu.core_type = #tpu.core_type<tc>, window_params = [{transform_indices = @transform_0, window_bounds = array<i64: 16, 4>}, {pipeline_mode = #tpu.pipeline_mode<synchronous>, transform_indices = @transform_1, window_bounds = array<i64: 4, 32>}, {pipeline_mode = #tpu.pipeline_mode<synchronous>, transform_indices = @transform_2, window_bounds = array<i64: 3, 32>}, {transform_indices = @transform_3, window_bounds = array<i64: 16, 32>}]} {
    %c0 = arith.constant 0 : index
    %c0_0 = arith.constant 0 : index
    %0 = vector.load %arg3[%c0, %c0_0] : memref<3x32xf32, #tpu.memory_space<vmem>>, vector<3x32xf32>
    %1 = vector.extract_strided_slice %0 {offsets = [0, 0], sizes = [1, 32], strides = [1, 1]} : vector<3x32xf32> to vector<1x32xf32>
    %2 = vector.extract_strided_slice %0 {offsets = [1, 0], sizes = [1, 32], strides = [1, 1]} : vector<3x32xf32> to vector<1x32xf32>
    %3 = vector.extract_strided_slice %0 {offsets = [2, 0], sizes = [1, 32], strides = [1, 1]} : vector<3x32xf32> to vector<1x32xf32>
    %c0_1 = arith.constant 0 : index
    %c0_2 = arith.constant 0 : index
    %4 = vector.load %arg1[%c0_1, %c0_2] : memref<16x4xf32, #tpu.memory_space<vmem>>, vector<16x4xf32>
    %c0_3 = arith.constant 0 : index
    %c0_4 = arith.constant 0 : index
    %5 = vector.load %arg2[%c0_3, %c0_4] : memref<4x32xf32, #tpu.memory_space<vmem>>, vector<4x32xf32>
    %cst = arith.constant dense<0.000000e+00> : vector<16x32xf32>
    %6 = tpu.matmul %4, %5, %cst {dimension_numbers = #tpu.dot_dimension_numbers<[1], [0], [0], [1], [0, 0, 1, 1], [], []>} : vector<16x4xf32>, vector<4x32xf32>, vector<16x32xf32> -> vector<16x32xf32>
    %7 = vector.broadcast %1 : vector<1x32xf32> to vector<16x32xf32>
    %8 = arith.addf %6, %7 : vector<16x32xf32>
    %cst_5 = arith.constant dense<0.000000e+00> : vector<16xf32>
    %9 = vector.multi_reduction <add>, %8, %cst_5 [1] : vector<16x32xf32> to vector<16xf32>
    %10 = vector.shape_cast %9 : vector<16xf32> to vector<16x1xf32>
    %cst_6 = arith.constant 3.200000e+01 : f32
    %11 = vector.broadcast %cst_6 : f32 to vector<16x1xf32>
    %12 = arith.divf %10, %11 : vector<16x1xf32>
    %13 = vector.broadcast %12 : vector<16x1xf32> to vector<16x32xf32>
    %14 = arith.subf %8, %13 : vector<16x32xf32>
    %15 = arith.mulf %14, %14 : vector<16x32xf32>
    %cst_7 = arith.constant dense<0.000000e+00> : vector<16xf32>
    %16 = vector.multi_reduction <add>, %15, %cst_7 [1] : vector<16x32xf32> to vector<16xf32>
    %17 = vector.shape_cast %16 : vector<16xf32> to vector<16x1xf32>
    %cst_8 = arith.constant 3.200000e+01 : f32
    %18 = vector.broadcast %cst_8 : f32 to vector<16x1xf32>
    %19 = arith.divf %17, %18 : vector<16x1xf32>
    %cst_9 = arith.constant 9.99999974E-6 : f32
    %20 = vector.broadcast %cst_9 : f32 to vector<16x1xf32>
    %21 = arith.addf %19, %20 : vector<16x1xf32>
    %22 = math.rsqrt %21 : vector<16x1xf32>
    %23 = vector.broadcast %22 : vector<16x1xf32> to vector<16x32xf32>
    %24 = arith.mulf %14, %23 : vector<16x32xf32>
    %25 = vector.broadcast %2 : vector<1x32xf32> to vector<16x32xf32>
    %26 = arith.mulf %24, %25 : vector<16x32xf32>
    %27 = vector.broadcast %3 : vector<1x32xf32> to vector<16x32xf32>
    %28 = arith.addf %26, %27 : vector<16x32xf32>
    %c0_10 = arith.constant 0 : index
    %c0_11 = arith.constant 0 : index
    %29 = vector.load %arg4[%c0_10, %c0_11] : memref<16x32xf32, #tpu.memory_space<vmem>>, vector<16x32xf32>
    tpu.vector_store %arg4[%c0_10, %c0_11], %28 {strides = array<i32>} : memref<16x32xf32, #tpu.memory_space<vmem>>, vector<16x32xf32>,
    return
  }
  func.func @transform_0(%arg0: i32) -> (i32, i32) {
    %c0_i32 = arith.constant 0 : i32
    %c0_i32_0 = arith.constant 0 : i32
    return %arg0, %c0_i32 : i32, i32
  }
  func.func @transform_1(%arg0: i32) -> (i32, i32) {
    %c0_i32 = arith.constant 0 : i32
    %c0_i32_0 = arith.constant 0 : i32
    %c0_i32_1 = arith.constant 0 : i32
    return %c0_i32, %c0_i32_0 : i32, i32
  }
  func.func @transform_2(%arg0: i32) -> (i32, i32) {
    %c0_i32 = arith.constant 0 : i32
    %c0_i32_0 = arith.constant 0 : i32
    %c0_i32_1 = arith.constant 0 : i32
    return %c0_i32, %c0_i32_0 : i32, i32
  }
  func.func @transform_3(%arg0: i32) -> (i32, i32) {
    %c0_i32 = arith.constant 0 : i32
    %c0_i32_0 = arith.constant 0 : i32
    return %arg0, %c0_i32 : i32, i32
  }
}

</mosaic_0001>

<llo_original>
// kernel: tpu_custom_call.1
$region0: #{tpu_custom_call.1}
  #allocation0 [shape = 'u32[]', space=smem, size = 0x4, offset = 0x4, fixed_abs, tag = 'smem constant byte address 0x4 - core index']
  #allocation1 [shape = 'u32[72,128]{1,0:T(1,128)}', space=vmem, size = 0x9000, scoped, tag = 'internal scratch']
  %s0 = inlined_call_operand.vmem [shape: f32[16,4], index: 0, kind: input, shape index: {}]
  %s1 = inlined_call_operand.vmem [shape: f32[4,32], index: 1, kind: input, shape index: {}]
  %s2 = inlined_call_operand.vmem [shape: f32[3,32], index: 2, kind: input, shape index: {}]
  %s3 = inlined_call_operand.hbm [shape: f32[16,32], index: 3, kind: output, shape index: {}]
  %s4 = sld [smem:[#allocation0]]
  $region22: #{tpu_custom_call.1} parent=0
    _
  %s6 = ssub.s32 1, %s4
  %s7 = scalar_select 0, %s6, %s4
  $region1: #{tpu_custom_call.1} parent=0
    #allocation2 [shape = 'u8[8192]{0}', space=vmem, size = 0x2000, scoped, tag = 'output window, operand 0, single buffered']
    #allocation3 [shape = 's32[1]{0}', space=sflag, size = 0x4, scoped, tag = 'scoped memory for tpu_custom_call.1']
    %8 = vsyncpa [#allocation3], 0
    // Predicated region
    $region2: #{tpu_custom_call.1} parent=1 // pred_check
      _
    $region3: #{tpu_custom_call.1} parent=1 // pred_check_branch
      %10 = sbr.rel (0) target = $region5
    $region4: #{tpu_custom_call.1} parent=1 // pred_region
      _
    $region5: #{tpu_custom_call.1} parent=1 // pred_fallthru
      _
    // Predicated region
    $region6: #{tpu_custom_call.1} parent=1 // pred_check
      _
    $region7: #{tpu_custom_call.1} parent=1 // pred_check_branch
      %12 = sbr.rel (0) target = $region9
    $region8: #{tpu_custom_call.1} parent=1 // pred_region
      _
    $region9: #{tpu_custom_call.1} parent=1 // pred_fallthru
      _
    // Predicated region
    $region10: #{tpu_custom_call.1} parent=1 // pred_check
      _
    $region11: #{tpu_custom_call.1} parent=1 // pred_check_branch
      %14 = sbr.rel (0) target = $region13
    $region12: #{tpu_custom_call.1} parent=1 // pred_region
      _
    $region13: #{tpu_custom_call.1} parent=1 // pred_fallthru
      _
    %v15 = vld [vmem:[%s2] sm:$0x7]
    %v16 = vld [vmem:[%s0] sm:$0xff]
    %v17 = vld [vmem:[%s0 + $0x8] sm:$0xff]
    %v18 = vld [vmem:[%s1] sm:$0xf]
    %v19 = vperm.slane %v15, 0
    %vm20 = vcmask 31744
    %v22 = vsel %vm20, %v16, 0
    %v25 = vsel %vm20, %v17, 0
    %vm27 = vcmask 1043456
    %v29 = vsel %vm27, %v18, 0
    %31 = vmatpush.msra.mxu0 0.0
    %32 = vmatpush.msra.mxu0 0.0
    %33 = vmatpush.msra.mxu0 0.0
    %34 = vmatpush.msra.mxu0 0.0
    %35 = vmatpush.msra.mxu0 0.0
    %36 = vmatpush.msra.mxu0 0.0
    %37 = vmatpush.msra.mxu0 0.0
    %38 = vmatpush.msra.mxu0 0.0
    %39 = vmatpush.msra.mxu0 0.0
    %40 = vmatpush.msra.mxu0 0.0
    %41 = vmatpush.msra.mxu0 0.0
    %42 = vmatpush.msra.mxu0 0.0
    %43 = vmatpush.msra.mxu0 0.0
    %44 = vmatpush.msra.mxu0 0.0
    %45 = vmatpush.msra.mxu0 0.0
    %46 = vmatpush.msra.mxu0 %v29
    %47 = vmatmul.f32.gmra.mxu0 %v22
    %v48 = vpop.f32.mrf.mxu0
    %v49 = vadd.f32 %v19, %v48
    %50 = vmatmul.f32.gmra.mxu0 %v25
    %v51 = vpop.f32.mrf.mxu0
    %v52 = vadd.f32 %v19, %v51
    %53 = vdwg.mxu0
    %vm54 = vcmask 261120
    %v55 = vsel %vm54, %v49, 0.0
    %56 = vadd.xlane.f32.xlu0 %v55
    %v57 = vpop.xlane.xlu0 %56
    %v58 = vsel %vm54, %v52, 0.0
    %59 = vadd.xlane.f32.xlu0 %v58
    %v60 = vpop.xlane.xlu0 %59
    %v61 = vrcp.pop 32.0
    %v62 = vmul.f32 32.0, %v61
    %v63 = vsub.f32 1.0, %v62
    %v64 = vmul.f32 %v61, %v63
    %v65 = vadd.f32 %v61, %v64
    %vm66 = vweird.f32 %v61
    %v67 = vsel %vm66, %v61, %v65
    %v68 = vmul.f32 %v57, %v67
    %v69 = vmul.f32 %v60, %v67
    %v70 = vsub.f32 %v49, %v68
    %v71 = vsub.f32 %v52, %v69
    %v72 = vmul.f32 %v70, %v70
    %v73 = vmul.f32 %v71, %v71
    %v74 = vsel %vm54, %v72, 0.0
    %75 = vadd.xlane.f32.xlu0 %v74
    %v76 = vpop.xlane.xlu0 %75
    %v77 = vsel %vm54, %v73, 0.0
    %78 = vadd.xlane.f32.xlu0 %v77
    %v79 = vpop.xlane.xlu0 %78
    %v80 = vmul.f32 %v76, %v67
    %v81 = vmul.f32 %v79, %v67
    %v82 = vadd.f32 %v80, 1e-05
    %v83 = vadd.f32 %v81, 1e-05
    %v84 = vrsqrt.pop %v82
    %v85 = vmul.f32 %v84, %v82
    %v86 = vmul.f32 %v85, %v84
    %v87 = vmul.f32 0.5, %v86
    %v88 = vsub.f32 1.5, %v87
    %v89 = vmul.f32 %v84, %v88
    %vm90 = vweird.f32 %v82
    %vm91 = vweird.f32 %v84
    %vm92 = vmor %vm90, %vm91
    %v93 = vsel %vm92, %v84, %v89
    %v94 = vrsqrt.pop %v83
    %v95 = vmul.f32 %v94, %v83
    %v96 = vmul.f32 %v95, %v94
    %v97 = vmul.f32 0.5, %v96
    %v98 = vsub.f32 1.5, %v97
    %v99 = vmul.f32 %v94, %v98
    %vm100 = vweird.f32 %v83
    %vm101 = vweird.f32 %v94
    %vm102 = vmor %vm100, %vm101
    %v103 = vsel %vm102, %v94, %v99
    %v104 = vmul.f32 %v70, %v93
    %v105 = vmul.f32 %v71, %v103
    %v106 = vperm.slane %v15, 1
    %v107 = vmul.f32 %v104, %v106
    %v108 = vmul.f32 %v105, %v106
    %v109 = vperm.slane %v15, 2
    %v110 = vadd.f32 %v107, %v109
    %v111 = vadd.f32 %v108, %v109
    %112 = vst.msk [vmem:[#allocation2] sm:$0xff] %vm54, %v110
    %113 = vst.msk [vmem:[#allocation2 + $0x8] sm:$0xff] %vm54, %v111
    // Predicated region
    $region14: #{tpu_custom_call.1} parent=1 // pred_check
      _
    $region15: #{tpu_custom_call.1} parent=1 // pred_check_branch
      %115 = sbr.rel (0) target = $region17
    $region16: #{tpu_custom_call.1} parent=1 // pred_region
      %117 = vsyncadd [#allocation3], 0
      %s118 = sshll.u32 [#allocation2], 4
      %s119 = int_to_ptr.vmem [resolvable:$true] %s118
      %s120 = sshll.u32 %s3, 4
      %s121 = int_to_ptr.hbm [resolvable:$true] %s120
      %126 = dma.vmem_to_hbm [thread:$0]  %s119, 256, %s121, [#allocation3], 128, 128, 8
    $region17: #{tpu_custom_call.1} parent=1 // pred_fallthru
      _
    // Predicated region
    $region18: #{tpu_custom_call.1} parent=1 // pred_check
      _
    $region19: #{tpu_custom_call.1} parent=1 // pred_check_branch
      %128 = sbr.rel (0) target = $region21
    $region20: #{tpu_custom_call.1} parent=1 // pred_region
      %130 = dma.done [#allocation3], 256
    $region21: #{tpu_custom_call.1} parent=1 // pred_fallthru
      _
    %131 = vsyncpa [#allocation3], 1

</llo_original>
